<compile_context>
chip_gen: v7x
topology: tpu7x:2x2x1
jax: 0.10.0
libtpu: 0.0.40
codegen_flags: <defaults>
</compile_context>

<pallas_src>
import jax
import jax.numpy as jnp
from jax.experimental import pallas as pl
from jax.experimental.pallas import tpu as pltpu


def _masked_conv2d_mm_kernel(w_ref, b_ref, p_ref, o_ref):
    """One MXU matmul per grid step over a lane-dense column tile.

    w_ref: (O, K)   masked, flattened weights (grid-invariant), K = C*KH*KW
    b_ref: (O, 1)   bias, f32 (grid-invariant)
    p_ref: (K, TC)  im2col patch columns for this tile (columns = batch x spatial)
    o_ref: (O, TC)  lane-dense output tile
    """
    acc = jnp.dot(w_ref[...], p_ref[...], preferred_element_type=jnp.float32)  # (O, TC) on MXU
    o_ref[...] = (acc + b_ref[...]).astype(o_ref.dtype)  # single broadcast add, unmasked store


def _round_up(x, m):
    return ((x + m - 1) // m) * m


def _pick_col_tile(nm, cap):
    """Largest multiple of 128 that divides nm (itself a multiple of 128) and is <= cap."""
    units = nm // 128
    cap_units = max(1, min(units, cap // 128))
    best = 1
    for d in range(1, cap_units + 1):
        if units % d == 0:
            best = d
    return best * 128


def masked_conv2d(x, weight, mask, bias, *, stride=1, padding=0, compute_dtype=jnp.bfloat16):
    """x: (N,C,H,W); weight/mask: (O,C,KH,KW); bias: (O,) or None.

    compute_dtype: dtype of the matmul operands (default bfloat16, native MXU rate);
    accumulation, bias add and the output stay float32-precision (output dtype = x.dtype).
    """
    N, C, H, W = x.shape
    O, Ci, KH, KW = weight.shape
    assert Ci == C
    Ho = (H + 2 * padding - KH) // stride + 1
    Wo = (W + 2 * padding - KW) // stride + 1
    K = C * KH * KW
    M = Ho * Wo
    Mpad = _round_up(M, 128)          # lane-dense spatial axis (unmasked vst even for small M)
    NM = N * Mpad                     # combined batch*spatial column axis

    # ---- wrapper-side glue (one-time / cheap XLA ops) ------------------------------
    w_flat = (weight * mask).reshape(O, K)        # mask applied once, not per grid step
    if bias is None:
        bias = jnp.zeros((O,), jnp.float32)
    b2 = bias.reshape(O, 1).astype(jnp.float32)

    # Padding + stride handled here so the kernel sees only contiguous, lane-dense data.
    xp = jnp.pad(x, ((0, 0), (0, 0), (padding, padding), (padding, padding)))
    cols = []
    for kh in range(KH):
        for kw in range(KW):
            sl = xp[:, :, kh:kh + (Ho - 1) * stride + 1:stride,
                          kw:kw + (Wo - 1) * stride + 1:stride]          # (N, C, Ho, Wo)
            cols.append(sl.reshape(N, C, M))
    # tap ordering (c, kh, kw) matches weight.reshape(O, C*KH*KW)
    patches = jnp.stack(cols, axis=2).reshape(N, K, M)                    # (N, K, M)
    patches = jnp.pad(patches, ((0, 0), (0, 0), (0, Mpad - M)))           # zero-pad spatial to 128x
    patches = patches.transpose(1, 0, 2).reshape(K, NM)                   # (K, N*Mpad) column layout

    if compute_dtype is not None:
        w_flat = w_flat.astype(compute_dtype)
        patches = patches.astype(compute_dtype)

    # ---- tiling / VMEM budget --------------------------------------------------------
    in_itemsize = jnp.dtype(patches.dtype).itemsize
    out_itemsize = jnp.dtype(x.dtype).itemsize
    # double-buffered patches + output tiles, plus (conservatively double-buffered)
    # grid-invariant weights and bias.
    fixed_bytes = 2 * O * K * in_itemsize + 2 * O * 4
    per_col_bytes = 2 * (K * in_itemsize + O * out_itemsize)
    budget_bytes = 40 * 1024 * 1024                        # safe vs v7x 64 MiB physical VMEM
    budget_cols = max(128, ((budget_bytes - fixed_bytes) // per_col_bytes) // 128 * 128)

    target_cols = 4096 // in_itemsize                      # 1024 cols f32, 2048 cols bf16
    tc = _pick_col_tile(NM, min(target_cols, budget_cols))
    if tc == NM and NM >= 256:
        # prefer >=2 grid steps (megacore sharding on v7x + compute/DMA overlap)
        tc = _pick_col_tile(NM, min(NM // 2, budget_cols))
    grid = (NM // tc,)

    used_bytes = fixed_bytes + per_col_bytes * tc
    vmem_limit = int(min(max(2 * used_bytes, 32 * 1024 * 1024), 48 * 1024 * 1024))

    out = pl.pallas_call(
        _masked_conv2d_mm_kernel,
        out_shape=jax.ShapeDtypeStruct((O, NM), x.dtype),
        grid_spec=pltpu.PrefetchScalarGridSpec(
            num_scalar_prefetch=0,
            grid=grid,
            in_specs=[
                pl.BlockSpec((O, K), lambda j: (0, 0)),    # masked weights (grid-invariant)
                pl.BlockSpec((O, 1), lambda j: (0, 0)),    # bias (grid-invariant)
                pl.BlockSpec((K, tc), lambda j: (0, j)),   # im2col column tile
            ],
            out_specs=pl.BlockSpec((O, tc), lambda j: (0, j)),
        ),
        compiler_params=pltpu.CompilerParams(
            dimension_semantics=("parallel",),
            vmem_limit_bytes=vmem_limit),
    )(w_flat, b2, patches)

    # (O, N*Mpad) -> (N, O, Ho, Wo), dropping the zero-padded spatial columns.
    out = out.reshape(O, N, Mpad).transpose(1, 0, 2)[:, :, :M]
    return out.reshape(N, O, Ho, Wo)


if __name__ == "__main__":
    # Module config: in_features=4, out_features=8, kernel_size=3, padding=1, stride=1
    N, C_in, C_out, H, W, Kk = 2, 4, 8, 16, 16, 3
    padding, stride = 1, 1

    key = jax.random.PRNGKey(0)
    kx, kw, kb = jax.random.split(key, 3)

    # Deterministic param init mirroring the module:
    #  - weight: kaiming_normal_ (fan_in mode, gain sqrt(2)), fan_in = C_in*K*K
    #  - bias:   uniform(-stdv, stdv), stdv = 1/sqrt(in_features)
    fan_in = C_in * Kk * Kk
    w_std = (2.0 / fan_in) ** 0.5
    weight = (w_std * jax.random.normal(kw, (C_out, C_in, Kk, Kk))).astype(jnp.float32)
    stdv = 1.0 / (C_in ** 0.5)
    bias = jax.random.uniform(kb, (C_out,), minval=-stdv, maxval=stdv, dtype=jnp.float32)
    mask = jnp.ones((C_out, C_in, Kk, Kk), jnp.float32)  # module inits mask to ones

    x = jax.random.normal(kx, (N, C_in, H, W), dtype=jnp.float32)

    # --- f32 operand path (tight tolerance) -------------------------------------------
    out = masked_conv2d(x, weight, mask, bias, stride=stride, padding=padding,
                        compute_dtype=jnp.float32)
    out = jax.block_until_ready(out)
    ref = jax.lax.conv_general_dilated(
        x, weight * mask, window_strides=(stride, stride),
        padding=[(padding, padding), (padding, padding)],
        dimension_numbers=("NCHW", "OIHW", "NCHW"),
    ) + bias[None, :, None, None]
    assert out.shape == (N, C_out, H, W)
    assert jnp.allclose(out, ref, atol=1e-4, rtol=1e-4)

    # --- pruned mask + stride=2 path, f32 operands (tight tolerance) ------------------
    mask2 = (jnp.abs(weight) > 0.1).astype(jnp.float32)
    out2 = masked_conv2d(x, weight, mask2, bias, stride=2, padding=1,
                         compute_dtype=jnp.float32)
    out2 = jax.block_until_ready(out2)
    ref2 = jax.lax.conv_general_dilated(
        x, weight * mask2, window_strides=(2, 2),
        padding=[(1, 1), (1, 1)],
        dimension_numbers=("NCHW", "OIHW", "NCHW"),
    ) + bias[None, :, None, None]
    assert jnp.allclose(out2, ref2, atol=1e-4, rtol=1e-4)

    # --- default bf16 operand path (looser tolerance: bf16 operands, f32 accumulation) -
    out3 = masked_conv2d(x, weight, mask, bias, stride=stride, padding=padding)
    out3 = jax.block_until_ready(out3)
    assert jnp.allclose(out3, ref, atol=5e-2, rtol=5e-2)

    print("KERNEL_OK")
</pallas_src>

<mosaic_0001>
module attributes {stable_mosaic.version = 11 : i64} {
  func.func @_masked_conv2d_mm_kernel(%arg0: i32, %arg1: memref<8x36xf32, #tpu.memory_space<vmem>>, %arg2: memref<8x1xf32, #tpu.memory_space<vmem>>, %arg3: memref<36x256xf32, #tpu.memory_space<vmem>>, %arg4: memref<8x256xf32, #tpu.memory_space<vmem>>) attributes {dimension_semantics = [#tpu.dimension_semantics<parallel>], iteration_bounds = array<i64: 2>, scalar_prefetch = 0 : i64, scratch_operands = 0 : i64, tpu.core_type = #tpu.core_type<tc>, window_params = [{pipeline_mode = #tpu.pipeline_mode<synchronous>, transform_indices = @transform_0, window_bounds = array<i64: 8, 36>}, {pipeline_mode = #tpu.pipeline_mode<synchronous>, transform_indices = @transform_1, window_bounds = array<i64: 8, 1>}, {transform_indices = @transform_2, window_bounds = array<i64: 36, 256>}, {transform_indices = @transform_3, window_bounds = array<i64: 8, 256>}]} {
    %c0 = arith.constant 0 : index
    %c0_0 = arith.constant 0 : index
    %0 = vector.load %arg1[%c0, %c0_0] : memref<8x36xf32, #tpu.memory_space<vmem>>, vector<8x36xf32>
    %c0_1 = arith.constant 0 : index
    %c0_2 = arith.constant 0 : index
    %1 = vector.load %arg3[%c0_1, %c0_2] : memref<36x256xf32, #tpu.memory_space<vmem>>, vector<36x256xf32>
    %cst = arith.constant dense<0.000000e+00> : vector<8x256xf32>
    %2 = tpu.matmul %0, %1, %cst {dimension_numbers = #tpu.dot_dimension_numbers<[1], [0], [0], [1], [0, 0, 1, 1], [], []>} : vector<8x36xf32>, vector<36x256xf32>, vector<8x256xf32> -> vector<8x256xf32>
    %c0_3 = arith.constant 0 : index
    %c0_4 = arith.constant 0 : index
    %3 = vector.load %arg2[%c0_3, %c0_4] : memref<8x1xf32, #tpu.memory_space<vmem>>, vector<8x1xf32>
    %4 = vector.broadcast %3 : vector<8x1xf32> to vector<8x256xf32>
    %5 = arith.addf %2, %4 : vector<8x256xf32>
    %c0_5 = arith.constant 0 : index
    %c0_6 = arith.constant 0 : index
    %6 = vector.load %arg4[%c0_5, %c0_6] : memref<8x256xf32, #tpu.memory_space<vmem>>, vector<8x256xf32>
    tpu.vector_store %arg4[%c0_5, %c0_6], %5 {strides = array<i32>} : memref<8x256xf32, #tpu.memory_space<vmem>>, vector<8x256xf32>,
    return
  }
  func.func @transform_0(%arg0: i32) -> (i32, i32) {
    %c0_i32 = arith.constant 0 : i32
    %c0_i32_0 = arith.constant 0 : i32
    %c0_i32_1 = arith.constant 0 : i32
    return %c0_i32, %c0_i32_0 : i32, i32
  }
  func.func @transform_1(%arg0: i32) -> (i32, i32) {
    %c0_i32 = arith.constant 0 : i32
    %c0_i32_0 = arith.constant 0 : i32
    %c0_i32_1 = arith.constant 0 : i32
    return %c0_i32, %c0_i32_0 : i32, i32
  }
  func.func @transform_2(%arg0: i32) -> (i32, i32) {
    %c0_i32 = arith.constant 0 : i32
    %c0_i32_0 = arith.constant 0 : i32
    return %c0_i32, %arg0 : i32, i32
  }
  func.func @transform_3(%arg0: i32) -> (i32, i32) {
    %c0_i32 = arith.constant 0 : i32
    %c0_i32_0 = arith.constant 0 : i32
    return %c0_i32, %arg0 : i32, i32
  }
}

</mosaic_0001>

<llo_original>
// kernel: tpu_custom_call.1
$region0: #{tpu_custom_call.1}
  #allocation0 [shape = 'u32[]', space=smem, size = 0x4, offset = 0x4, fixed_abs, tag = 'smem constant byte address 0x4 - core index']
  #allocation1 [shape = 'u32[144,128]{1,0:T(1,128)}', space=vmem, size = 0x12000, scoped, tag = 'internal scratch']
  %s0 = inlined_call_operand.vmem [shape: f32[8,36], index: 0, kind: input, shape index: {}]
  %s1 = inlined_call_operand.vmem [shape: f32[8,1], index: 1, kind: input, shape index: {}]
  %s2 = inlined_call_operand.hbm [shape: f32[36,512], index: 2, kind: input, shape index: {}]
  %s3 = inlined_call_operand.hbm [shape: f32[8,512], index: 3, kind: output, shape index: {}]
  %s4 = sld [smem:[#allocation0]]
  $region49: #{tpu_custom_call.1} parent=0
    _
  %s6 = ssub.s32 1, %s4
  %s7 = scalar_select 0, %s6, %s4
  $region1: #{tpu_custom_call.1} parent=0
    #allocation2 [shape = 'u8[81920]{0}', space=vmem, size = 0x14000, scoped, tag = 'input window, operand 2']
    #allocation3 [shape = 's32[2]{0}', space=sflag, size = 0x8, scoped, tag = 'scoped memory for tpu_custom_call.1']
    #allocation4 [shape = 's32[2]{0}', space=sflag, size = 0x8, scoped, tag = 'scoped memory for tpu_custom_call.1']
    #allocation5 [shape = 'u8[16384]{0}', space=vmem, size = 0x4000, scoped, tag = 'output window, operand 0']
    %8 = vsyncpa [#allocation3], 0
    %s9 = scalar_lea.sflag [#allocation3], 1
    %10 = vsyncpa %s9, 0
    %11 = vsyncpa [#allocation4], 0
    %s12 = scalar_lea.sflag [#allocation4], 1
    %13 = vsyncpa %s12, 0
    loop: start=0, step=1, limit=4
    $region2: #{tpu_custom_call.1} parent=1 // loop_pre_header
      _
    $region3: #{tpu_custom_call.1} parent=1 // loop_header
      %s15 = sphi 0, %s19
      %p16 = scmp.ge.s32.totalorder %s15, 4
      %s23 = sphi 0, %s23
      %s25 = sphi 0, %s23
      %s26 = sphi 0, %s25
      %s40 = sphi 0, %s26
      %s44 = sphi 0, %s44
      %s46 = sphi 0, %s44
      %s47 = sphi 0, %s46
      %s61 = sphi 0, %s47
      %s67 = sphi 0, %s69
      %s70 = sphi 0, %s67
      %s71 = sphi 0, %s70
      %s87 = sphi 0, %s71
      %s93 = sphi 0, %s95
      %s96 = sphi 0, %s93
      %s97 = sphi 0, %s96
      %s113 = sphi 0, %s97
    $region4: #{tpu_custom_call.1} parent=1 // loop_header_branch
      %18 = sbr.rel (%p16) target = $region8
    $region5: #{tpu_custom_call.1} parent=1 // loop_body
      %s20 = ssub.s32 %s15, 1
      %s21 = ssub.s32 %s15, 2
      %s22 = sadd.s32 %s15, 1
      %s24 = sadd.s32 %s23, 1
      %p27 = scmp.eq.s32.totalorder %s15, 1
      %p28 = scmp.ne.s32.totalorder %s23, %s25
      %p29 = scmp.eq.s32.totalorder %s15, 0
      %p30 = por %p28, %p29
      %p31 = scmp.ne.s32.totalorder %s23, %s25
      %p32 = scmp.eq.s32.totalorder %s20, 1
      %p33 = por %p31, %p32
      %p34 = scmp.ne.s32.totalorder %s25, %s26
      %p35 = scmp.eq.s32.totalorder %s20, 0
      %p36 = por %p34, %p35
      %p37 = scmp.ne.s32.totalorder %s25, %s26
      %p38 = scmp.eq.s32.totalorder %s21, 1
      %p39 = por %p37, %p38
      %p41 = scmp.ne.s32.totalorder %s26, %s40
      %p42 = scmp.eq.s32.totalorder %s21, 0
      %p43 = por %p41, %p42
      %s45 = sadd.s32 %s44, 1
      %p48 = scmp.eq.s32.totalorder %s15, 1
      %p49 = scmp.ne.s32.totalorder %s44, %s46
      %p50 = scmp.eq.s32.totalorder %s15, 0
      %p51 = por %p49, %p50
      %p52 = scmp.ne.s32.totalorder %s44, %s46
      %p53 = scmp.eq.s32.totalorder %s20, 1
      %p54 = por %p52, %p53
      %p55 = scmp.ne.s32.totalorder %s46, %s47
      %p56 = scmp.eq.s32.totalorder %s20, 0
      %p57 = por %p55, %p56
      %p58 = scmp.ne.s32.totalorder %s46, %s47
      %p59 = scmp.eq.s32.totalorder %s21, 1
      %p60 = por %p58, %p59
      %p62 = scmp.ne.s32.totalorder %s47, %s61
      %p63 = scmp.eq.s32.totalorder %s21, 0
      %p64 = por %p62, %p63
      %s65 = ssub.s32 %s15, %s22
      %p66 = scmp.eq.s32.totalorder %s65, 0
      %s68 = sadd.s32 %s67, 1
      %s69 = scalar_select %p66, %s67, %s68
      %p72 = pneg %p66
      %p73 = scmp.eq.s32.totalorder %s15, 1
      %p74 = por %p72, %p73
      %p75 = scmp.ne.s32.totalorder %s67, %s70
      %p76 = scmp.eq.s32.totalorder %s15, 0
      %p77 = por %p75, %p76
      %p78 = scmp.ne.s32.totalorder %s67, %s70
      %p79 = scmp.eq.s32.totalorder %s20, 1
      %p80 = por %p78, %p79
      %p81 = scmp.ne.s32.totalorder %s70, %s71
      %p82 = scmp.eq.s32.totalorder %s20, 0
      %p83 = por %p81, %p82
      %p84 = scmp.ne.s32.totalorder %s70, %s71
      %p85 = scmp.eq.s32.totalorder %s21, 1
      %p86 = por %p84, %p85
      %p88 = scmp.ne.s32.totalorder %s71, %s87
      %p89 = scmp.eq.s32.totalorder %s21, 0
      %p90 = por %p88, %p89
      %s91 = ssub.s32 %s15, %s22
      %p92 = scmp.eq.s32.totalorder %s91, 0
      %s94 = sadd.s32 %s93, 1
      %s95 = scalar_select %p92, %s93, %s94
      %p98 = pneg %p92
      %p99 = scmp.eq.s32.totalorder %s15, 1
      %p100 = por %p98, %p99
      %p101 = scmp.ne.s32.totalorder %s93, %s96
      %p102 = scmp.eq.s32.totalorder %s15, 0
      %p103 = por %p101, %p102
      %p104 = scmp.ne.s32.totalorder %s93, %s96
      %p105 = scmp.eq.s32.totalorder %s20, 1
      %p106 = por %p104, %p105
      %p107 = scmp.ne.s32.totalorder %s96, %s97
      %p108 = scmp.eq.s32.totalorder %s20, 0
      %p109 = por %p107, %p108
      %p110 = scmp.ne.s32.totalorder %s96, %s97
      %p111 = scmp.eq.s32.totalorder %s21, 1
      %p112 = por %p110, %p111
      %p114 = scmp.ne.s32.totalorder %s97, %s113
      %p115 = scmp.eq.s32.totalorder %s21, 0
      %p116 = por %p114, %p115
      %p117 = scmp.le.s32.totalorder 1, %s15
      %p118 = scmp.lt.s32.totalorder %s15, 3
      %p119 = pnand %p117, %p118
      %p120 = pneg %p119
      // Predicated region
      $region9: #{tpu_custom_call.1} parent=5 // pred_check
        _
      $region10: #{tpu_custom_call.1} parent=5 // pred_check_branch
        %122 = sbr.rel (%p119) target = $region12
      $region11: #{tpu_custom_call.1} parent=5 // pred_region
        %s123 = ssub.s32 %s15, 1
        // Predicated region
        $region13: #{tpu_custom_call.1} parent=11 // pred_check
          %p124 = pneg %p36
        $region14: #{tpu_custom_call.1} parent=11 // pred_check_branch
          %126 = sbr.rel (%p124) target = $region16
        $region15: #{tpu_custom_call.1} parent=11 // pred_region
          _
        $region16: #{tpu_custom_call.1} parent=11 // pred_fallthru
          _
        // Predicated region
        $region17: #{tpu_custom_call.1} parent=11 // pred_check
          %p127 = pneg %p57
        $region18: #{tpu_custom_call.1} parent=11 // pred_check_branch
          %129 = sbr.rel (%p127) target = $region20
        $region19: #{tpu_custom_call.1} parent=11 // pred_region
          _
        $region20: #{tpu_custom_call.1} parent=11 // pred_fallthru
          _
      $region12: #{tpu_custom_call.1} parent=5 // pred_fallthru
        _
      %p130 = scmp.lt.s32.totalorder %s15, 2
      // Predicated region
      $region21: #{tpu_custom_call.1} parent=5 // pred_check
        %p131 = pneg %p130
      $region22: #{tpu_custom_call.1} parent=5 // pred_check_branch
        %133 = sbr.rel (%p131) target = $region24
      $region23: #{tpu_custom_call.1} parent=5 // pred_region
        // Predicated region
        $region25: #{tpu_custom_call.1} parent=23 // pred_check
          %p134 = pneg %p77
        $region26: #{tpu_custom_call.1} parent=23 // pred_check_branch
          %136 = sbr.rel (%p134) target = $region28
        $region27: #{tpu_custom_call.1} parent=23 // pred_region
          %s137 = sand.u32 %s67, 1
          %s138 = scalar_lea.sflag [#allocation3], %s137
          %s139 = sand.u32 %s67, 1
          %s140 = smul.addr %s139, 80
          %s141 = scalar_lea.vmem [#allocation2], %s140
          %s142 = smul.u32 2, %s15
          %s144 = ssub.s32 1280, 1280
          %145 = vsyncadd %s138, %s144
          %s146 = smul.addr %s142, 128
          %s147 = scalar_lea.hbm %s2, %s146
          %s148 = sshll.u32 %s141, 4
          %s149 = int_to_ptr.vmem [resolvable:$true] %s148
          %154 = dma.hbm_to_vmem [thread:$0]  %s147, 1280, %s149, %s138, 512, 256, 16
        $region28: #{tpu_custom_call.1} parent=23 // pred_fallthru
          _
      $region24: #{tpu_custom_call.1} parent=5 // pred_fallthru
        _
      %p155 = scmp.le.s32.totalorder 1, %s15
      %p156 = scmp.lt.s32.totalorder %s15, 3
      %p157 = pnand %p155, %p156
      %p158 = pneg %p157
      // Predicated region
      $region29: #{tpu_custom_call.1} parent=5 // pred_check
        _
      $region30: #{tpu_custom_call.1} parent=5 // pred_check_branch
        %160 = sbr.rel (%p157) target = $region32
      $region31: #{tpu_custom_call.1} parent=5 // pred_region
        %s161 = ssub.s32 %s15, 1
        %s162 = sand.u32 %s70, 1
        %s163 = scalar_lea.sflag [#allocation3], %s162
        %s164 = sand.u32 %s70, 1
        %s165 = smul.addr %s164, 80
        %s166 = scalar_lea.vmem [#allocation2], %s165
        // Predicated region
        $region33: #{tpu_custom_call.1} parent=31 // pred_check
          %p167 = pneg %p83
        $region34: #{tpu_custom_call.1} parent=31 // pred_check_branch
          %169 = sbr.rel (%p167) target = $region36
        $region35: #{tpu_custom_call.1} parent=31 // pred_region
          %170 = dma.done %s163, 1280
        $region36: #{tpu_custom_call.1} parent=31 // pred_fallthru
          _
        %p171 = pneg %p36
        %p172 = pneg %p33
        %p173 = pneg %p57
        %p174 = pneg %p54
        %s175 = sand.u32 %s70, 1
        %s176 = scalar_lea.sflag [#allocation3], %s175
        %s177 = sand.u32 %s70, 1
        %s178 = smul.addr %s177, 80
        %s179 = scalar_lea.vmem [#allocation2], %s178
        %p180 = pneg %p83
        %p181 = pneg %p80
        %p182 = pneg %p109
        %p183 = pneg %p106
        %s184 = sand.u32 %s96, 1
        %s185 = scalar_lea.sflag [#allocation4], %s184
        %s186 = sand.u32 %s96, 1
        %s187 = smul.addr %s186, 16
        %s188 = scalar_lea.vmem [#allocation5], %s187
        %s189 = smul.u32 2, %s20
        %s190 = smul.u32 2, %s20
        %v191 = vld [vmem:[%s0] sm:$0xff]
        %v192 = vld [vmem:[%s166] sm:$0xff]
        %v193 = vld [vmem:[%s166 + $0x8] sm:$0xff]
        %v194 = vld [vmem:[%s166 + $0x10] sm:$0xff]
        %v195 = vld [vmem:[%s166 + $0x18] sm:$0xff]
        %v196 = vld [vmem:[%s166 + $0x20] sm:$0xff]
        %v197 = vld [vmem:[%s166 + $0x28] sm:$0xff]
        %v198 = vld [vmem:[%s166 + $0x30] sm:$0xff]
        %v199 = vld [vmem:[%s166 + $0x38] sm:$0xff]
        %v200 = vld [vmem:[%s166 + $0x40] sm:$0xf]
        %v201 = vld [vmem:[%s166 + $0x48] sm:$0xf]
        %v202 = vld [vmem:[%s1] sm:$0xff]
        %204 = vset.pattern.permute.xlu0 0
        %205 = vperm.xlu0 %204, %v202
        %v206 = vpop.permute.xlu0 %205
        %vm208 = vcmask 293888
        %v210 = vsel %vm208, %v191, 0
        %vm212 = vcmask 1043456
        %v214 = vsel %vm212, %v200, 0
        %v217 = vsel %vm212, %v201, 0
        %219 = vmatprep.subr.mxu0 %v193
        %220 = vmatpush1.msra.mxu0 %v192
        %221 = vmatprep.subr.mxu0 %v195
        %222 = vmatpush1.msra.mxu0 %v194
        %223 = vmatprep.subr.mxu0 %v197
        %224 = vmatpush1.msra.mxu0 %v196
        %225 = vmatprep.subr.mxu0 %v199
        %226 = vmatpush1.msra.mxu0 %v198
        %227 = vmatprep.subr.mxu0 %v217
        %228 = vmatpush1.msra.mxu0 %v214
        %229 = vmatprep.subr.mxu0 0.0
        %230 = vmatpush1.msra.mxu0 0.0
        %231 = vmatprep.subr.mxu0 0.0
        %232 = vmatpush1.msra.mxu0 0.0
        %233 = vmatprep.subr.mxu0 0.0
        %234 = vmatpush1.msra.mxu0 0.0
        %235 = vmatprep.subr.mxu0 0.0
        %236 = vmatpush1.msra.mxu0 0.0
        %237 = vmatprep.subr.mxu0 0.0
        %238 = vmatpush1.msra.mxu0 0.0
        %239 = vmatprep.subr.mxu0 0.0
        %240 = vmatpush1.msra.mxu0 0.0
        %241 = vmatprep.subr.mxu0 0.0
        %242 = vmatpush1.msra.mxu0 0.0
        %243 = vmatprep.subr.mxu0 0.0
        %244 = vmatpush1.msra.mxu0 0.0
        %245 = vmatprep.subr.mxu0 0.0
        %246 = vmatpush1.msra.mxu0 0.0
        %247 = vmatprep.subr.mxu0 0.0
        %248 = vmatpush1.msra.mxu0 0.0
        %249 = vmatprep.subr.mxu0 0.0
        %250 = vmatpush1.msra.mxu0 0.0
        %251 = vmatprep.subr.mxu0 0.0
        %252 = vmatpush1.msra.mxu0 0.0
        %253 = vmatprep.subr.mxu0 0.0
        %254 = vmatpush1.msra.mxu0 0.0
        %255 = vmatprep.subr.mxu0 0.0
        %256 = vmatpush1.msra.mxu0 0.0
        %257 = vmatprep.subr.mxu0 0.0
        %258 = vmatpush1.msra.mxu0 0.0
        %259 = vmatprep.subr.mxu0 0.0
        %260 = vmatpush1.msra.mxu0 0.0
        %261 = vmatprep.subr.mxu0 0.0
        %262 = vmatpush1.msra.mxu0 0.0
        %263 = vmatprep.subr.mxu0 0.0
        %264 = vmatpush1.msra.mxu0 0.0
        %265 = vmatprep.subr.mxu0 0.0
        %266 = vmatpush1.msra.mxu0 0.0
        %267 = vmatprep.subr.mxu0 0.0
        %268 = vmatpush1.msra.mxu0 0.0
        %269 = vmatprep.subr.mxu0 0.0
        %270 = vmatpush1.msra.mxu0 0.0
        %271 = vmatprep.subr.mxu0 0.0
        %272 = vmatpush1.msra.mxu0 0.0
        %273 = vmatprep.subr.mxu0 0.0
        %274 = vmatpush1.msra.mxu0 0.0
        %275 = vmatprep.subr.mxu0 0.0
        %276 = vmatpush1.msra.mxu0 0.0
        %277 = vmatprep.subr.mxu0 0.0
        %278 = vmatpush1.msra.mxu0 0.0
        %279 = vmatprep.subr.mxu0 0.0
        %280 = vmatpush1.msra.mxu0 0.0
        %281 = vmatprep.subr.mxu0 0.0
        %282 = vmatpush1.msra.mxu0 0.0
        %283 = vmatprep.mubr.f32.mxu0 0.0
        %284 = vmatmul.mubr.f32.gmra.mrb[0].mxu0 %v210
        %v285 = vpop.f32.mrb[0].mxu0
        %v286 = vadd.f32 %v206, %v285
        %v287 = vpop.f32.mrb[0].mxu0
        %v288 = vadd.f32 %v206, %v287
        %289 = vdwg.mxu0
        %290 = vst [vmem:[%s188] sm:$0xff] %v286
        %291 = vst [vmem:[%s188 + $0x8] sm:$0xff] %v288
        %s292 = sand.u32 %s96, 1
        %s293 = scalar_lea.sflag [#allocation4], %s292
        %s294 = sand.u32 %s96, 1
        %s295 = smul.addr %s294, 16
        %s296 = scalar_lea.vmem [#allocation5], %s295
        // Predicated region
        $region37: #{tpu_custom_call.1} parent=31 // pred_check
          %p297 = pneg %p106
        $region38: #{tpu_custom_call.1} parent=31 // pred_check_branch
          %299 = sbr.rel (%p297) target = $region40
        $region39: #{tpu_custom_call.1} parent=31 // pred_region
          %s300 = smul.u32 2, %s20
          %s302 = ssub.s32 256, 256
          %303 = vsyncadd %s293, %s302
          %s304 = smul.addr %s300, 128
          %s305 = scalar_lea.hbm %s3, %s304
          %s307 = sshll.u32 %s296, 4
          %s308 = int_to_ptr.vmem [resolvable:$true] %s307
          %310 = dma.vmem_to_hbm [thread:$0]  %s308, 256, %s305, %s293
        $region40: #{tpu_custom_call.1} parent=31 // pred_fallthru
          _
      $region32: #{tpu_custom_call.1} parent=5 // pred_fallthru
        _
      %p311 = scmp.le.s32.totalorder 2, %s15
      // Predicated region
      $region41: #{tpu_custom_call.1} parent=5 // pred_check
        %p312 = pneg %p311
      $region42: #{tpu_custom_call.1} parent=5 // pred_check_branch
        %314 = sbr.rel (%p312) target = $region44
      $region43: #{tpu_custom_call.1} parent=5 // pred_region
        %s315 = ssub.s32 %s15, 2
        // Predicated region
        $region45: #{tpu_custom_call.1} parent=43 // pred_check
          %p316 = pneg %p112
        $region46: #{tpu_custom_call.1} parent=43 // pred_check_branch
          %318 = sbr.rel (%p316) target = $region48
        $region47: #{tpu_custom_call.1} parent=43 // pred_region
          %s319 = sand.u32 %s97, 1
          %s320 = scalar_lea.sflag [#allocation4], %s319
          %s321 = sand.u32 %s97, 1
          %s322 = smul.addr %s321, 16
          %s323 = scalar_lea.vmem [#allocation5], %s322
          %324 = dma.done %s320, 256
        $region48: #{tpu_custom_call.1} parent=43 // pred_fallthru
          _
      $region44: #{tpu_custom_call.1} parent=5 // pred_fallthru
        _
    $region6: #{tpu_custom_call.1} parent=1 // loop_footer
      %s19 = sadd.s32 1, %s15
    $region7: #{tpu_custom_call.1} parent=1 // loop_footer_branch
      %14 = sbr.rel target = $region3
    $region8: #{tpu_custom_call.1} parent=1 // loop_exit
      _
    %325 = vsyncpa [#allocation3], 1
    %s326 = scalar_lea.sflag [#allocation3], 1
    %327 = vsyncpa %s326, 1
    %328 = vsyncpa [#allocation4], 1
    %s329 = scalar_lea.sflag [#allocation4], 1
    %330 = vsyncpa %s329, 1

</llo_original>
